<compile_context>
chip_gen: v6e
topology: v6e:2x2x1
jax: 0.10.0
libtpu: 0.0.40
codegen_flags: <defaults>
</compile_context>

<pallas_src>
import functools
import math

import jax
import jax.numpy as jnp
from jax import lax
from jax.experimental import pallas as pl
from jax.experimental.pallas import tpu as pltpu


_NEG_INF = -1.0e9  # matches the PyTorch masked_fill value


def _pow2_divisors(n, lo=8):
    """Powers of two in [lo, n] that divide n (ascending); falls back to [n]."""
    out = []
    t = lo
    while t <= n:
        if n % t == 0:
            out.append(t)
        t *= 2
    return out or [n]


def _compiler_params(semantics, est_vmem_bytes):
    # Headroom above the per-call estimate, but stay under every chip's budget
    # (v5e scoped default is 16 MiB, v7x has only 64 MiB physical VMEM).
    limit = int(min(48 << 20, max(16 << 20, 2 * int(est_vmem_bytes))))
    return pltpu.CompilerParams(dimension_semantics=semantics,
                                vmem_limit_bytes=limit)


# ---------------------------------------------------------------------------
# Kernel 1: full-width row-tiled projection, emitted head-major.
#   y = x_tile @ W + b  with W = concat of 1..3 (D, D) weights -> (D, n_out*D)
#   then each output t gets head slices y[:, t*D + h*dh : t*D + (h+1)*dh].
# ---------------------------------------------------------------------------
def _proj_heads_kernel(x_ref, w_ref, b_ref, *out_refs, d_model, d_head):
    # One wide MXU matmul (full N fill), f32 accumulation.
    y = jnp.dot(x_ref[0], w_ref[...], preferred_element_type=jnp.float32)
    y = y + b_ref[...].astype(jnp.float32)
    n_heads = d_model // d_head
    for t, o_ref in enumerate(out_refs):
        base = t * d_model
        for h in range(n_heads):
            o_ref[h, 0] = y[:, base + h * d_head:base + (h + 1) * d_head
                            ].astype(o_ref.dtype)


def _project_to_heads(x, weights, biases, *, num_heads, out_dtype,
                      vmem_budget_bytes):
    """x: (B, T, D); weights: list of (D, D); biases: list of (D,).

    Returns a tuple of len(weights) tensors shaped (H, B, T, d_head) in
    out_dtype.  All projections in the list share one read of x.
    """
    B, T, D = x.shape
    H = num_heads
    dh = D // H
    n_out = len(weights)

    w = jnp.concatenate(weights, axis=1)                    # (D, n_out*D)
    b = jnp.concatenate(biases, axis=0).reshape(1, n_out * D)

    out_bytes = jnp.dtype(out_dtype).itemsize
    x_bytes = x.dtype.itemsize
    w_resident = w.size * w.dtype.itemsize + b.size * b.dtype.itemsize

    # Row tile from the VMEM budget (weights resident + double-buffered tiles).
    tm = _pow2_divisors(T)[0]
    for cand in _pow2_divisors(T):
        per_step = (2 * cand * D * x_bytes              # x tile (double-buffered)
                    + cand * n_out * D * 4              # f32 matmul result
                    + 2 * n_out * cand * D * out_bytes)  # out tiles (double-buffered)
        if w_resident + per_step <= vmem_budget_bytes:
            tm = cand
    n_rows = T // tm
    est = (w_resident + 2 * tm * D * x_bytes + tm * n_out * D * 4
           + 2 * n_out * tm * D * out_bytes)

    kernel = functools.partial(_proj_heads_kernel, d_model=D, d_head=dh)
    outs = pl.pallas_call(
        kernel,
        out_shape=tuple(jax.ShapeDtypeStruct((H, B, T, dh), out_dtype)
                        for _ in range(n_out)),
        grid_spec=pltpu.PrefetchScalarGridSpec(
            num_scalar_prefetch=0,
            grid=(B, n_rows),
            in_specs=[
                pl.BlockSpec((1, tm, D), lambda bi, r: (bi, r, 0)),
                # Constant block index -> weights/bias DMA'd once, stay resident.
                pl.BlockSpec((D, n_out * D), lambda bi, r: (0, 0)),
                pl.BlockSpec((1, n_out * D), lambda bi, r: (0, 0)),
            ],
            out_specs=tuple(
                pl.BlockSpec((H, 1, tm, dh), lambda bi, r: (0, bi, r, 0))
                for _ in range(n_out)),
        ),
        compiler_params=_compiler_params(("parallel", "arbitrary"), est),
    )(x, w, b)
    return outs


# ---------------------------------------------------------------------------
# Kernel 2: scaled dot-product attention, tiled over query rows.
#   Inputs are head-major (H, B, T, dh); K/V blocks are resident across the
#   inner q-tile axis.  Scale is pre-folded into Wq.
# ---------------------------------------------------------------------------
def _attend_store(q_ref, k_ref, v_ref, mask_ref, ctx_ref, attn_ref):
    q = q_ref[0, 0]                      # (tq, dh)  compute dtype (bf16)
    k = k_ref[0, 0]                      # (Tk, dh)
    v = v_ref[0, 0]                      # (Tk, dh)
    # q @ k^T with no explicit transpose: contract the last dims on the MXU,
    # f32 accumulation.
    s = lax.dot_general(q, k, (((1,), (1,)), ((), ())),
                        preferred_element_type=jnp.float32)
    if mask_ref is not None:
        # Additive -1e9 mask (bf16 in HBM).  For partially masked rows this is
        # bit-equivalent to masked_fill; fully-masked rows differ slightly.
        s = s + mask_ref[0].astype(jnp.float32)
    m = jnp.max(s, axis=-1, keepdims=True)
    e = jnp.exp(s - m)
    # Exact reciprocal so the *returned* attention rows sum to 1; bf16 storage
    # of attn is the dominant rounding anyway.
    p = e * pl.reciprocal(jnp.sum(e, axis=-1, keepdims=True))
    attn_ref[0] = p.astype(attn_ref.dtype)
    ctx = jnp.dot(p.astype(v.dtype), v, preferred_element_type=jnp.float32)
    ctx_ref[0, 0] = ctx.astype(ctx_ref.dtype)


def _sdpa_kernel(q_ref, k_ref, v_ref, ctx_ref, attn_ref):
    _attend_store(q_ref, k_ref, v_ref, None, ctx_ref, attn_ref)


def _sdpa_masked_kernel(q_ref, k_ref, v_ref, mask_ref, ctx_ref, attn_ref):
    _attend_store(q_ref, k_ref, v_ref, mask_ref, ctx_ref, attn_ref)


def scaled_dot_product_attention(q, k, v, *, mask_add=None,
                                 attn_dtype=jnp.bfloat16,
                                 ctx_dtype=jnp.float32,
                                 vmem_budget_bytes=16 << 20):
    """q/k/v: (H, B, T, dh) head-major.

    Returns (context (H, B, Tq, dh) in ctx_dtype, attn (H*B, Tq, Tk) in attn_dtype).
    """
    H, B, Tq, dh = q.shape
    Tk = k.shape[2]
    kv_bytes = q.dtype.itemsize
    attn_bytes = jnp.dtype(attn_dtype).itemsize
    mask_bytes = mask_add.dtype.itemsize if mask_add is not None else 0

    # VMEM budget: K+V resident (double-buffered) + per-q-tile working set.
    kv_resident = 2 * 2 * Tk * dh * kv_bytes

    def per_step(tq):
        return (2 * tq * dh * kv_bytes        # q tile (double-buffered)
                + 2 * tq * Tk * attn_bytes    # attn out tile (double-buffered)
                + 2 * tq * dh * 4             # ctx out tile (f32, double-buffered)
                + 2 * tq * Tk * mask_bytes    # mask tile (double-buffered)
                + 3 * tq * Tk * 4)            # s / e / p f32 temporaries

    cands = _pow2_divisors(Tq)
    tq = cands[0]
    for cand in cands:
        if kv_resident + per_step(cand) <= vmem_budget_bytes:
            tq = cand
    n_tq = Tq // tq
    est = kv_resident + per_step(tq)

    in_specs = [
        pl.BlockSpec((1, 1, tq, dh), lambda b, h, j: (h, b, j, 0)),
        # Constant block index across the inner q-tile axis -> K/V resident.
        pl.BlockSpec((1, 1, Tk, dh), lambda b, h, j: (h, b, 0, 0)),
        pl.BlockSpec((1, 1, Tk, dh), lambda b, h, j: (h, b, 0, 0)),
    ]
    inputs = [q, k, v]
    if mask_add is None:
        kernel = _sdpa_kernel
    else:
        kernel = _sdpa_masked_kernel
        # Mask is kept at (B, Tq, Tk) (never repeated H times in HBM); with a
        # single q tile it is also resident across the head axis.
        in_specs.append(pl.BlockSpec((1, tq, Tk), lambda b, h, j: (b, j, 0)))
        inputs.append(mask_add)

    ctx, attn = pl.pallas_call(
        kernel,
        out_shape=(jax.ShapeDtypeStruct((H, B, Tq, dh), ctx_dtype),
                   jax.ShapeDtypeStruct((H * B, Tq, Tk), attn_dtype)),
        grid_spec=pltpu.PrefetchScalarGridSpec(
            num_scalar_prefetch=0,
            grid=(B, H, n_tq),
            in_specs=in_specs,
            out_specs=(
                pl.BlockSpec((1, 1, tq, dh), lambda b, h, j: (h, b, j, 0)),
                # PyTorch layout: attn batch index = head * batch_size + batch.
                pl.BlockSpec((1, tq, Tk), lambda b, h, j: (h * B + b, j, 0)),
            ),
        ),
        compiler_params=_compiler_params(
            ("parallel", "parallel", "arbitrary"), est),
    )(*inputs)
    return ctx, attn


# ---------------------------------------------------------------------------
# MultiHeadAttention forward (glue in plain JAX, hot paths in Pallas)
# ---------------------------------------------------------------------------
def multi_head_attention(query, key, value, params, *, num_heads, mask=None,
                         compute_dtype=jnp.bfloat16, attn_dtype=jnp.bfloat16,
                         vmem_budget_bytes=16 << 20):
    """query/key/value: (B, T, D).  Returns (context (B, Tq, D), attn (H*B, Tq, Tk))."""
    B, Tq, D = query.shape
    dh = D // num_heads
    scale = 1.0 / math.sqrt(dh)

    # Fold the 1/sqrt(d_head) softmax scale into the query projection.
    wq = params["wq"] * scale
    bq = params["bq"] * scale

    if query is key and key is value:
        # Self-attention: fused (D, 3D) projection -> x read from HBM once.
        q, k, v = _project_to_heads(
            query,
            [wq, params["wk"], params["wv"]],
            [bq, params["bk"], params["bv"]],
            num_heads=num_heads, out_dtype=compute_dtype,
            vmem_budget_bytes=vmem_budget_bytes)
    else:
        # TODO(synk): also fuse the key/value projections when `key is value`.
        (q,) = _project_to_heads(query, [wq], [bq], num_heads=num_heads,
                                 out_dtype=compute_dtype,
                                 vmem_budget_bytes=vmem_budget_bytes)
        (k,) = _project_to_heads(key, [params["wk"]], [params["bk"]],
                                 num_heads=num_heads, out_dtype=compute_dtype,
                                 vmem_budget_bytes=vmem_budget_bytes)
        (v,) = _project_to_heads(value, [params["wv"]], [params["bv"]],
                                 num_heads=num_heads, out_dtype=compute_dtype,
                                 vmem_budget_bytes=vmem_budget_bytes)

    mask_add = None
    if mask is not None:
        # PyTorch masked_fill(mask, -1e9) as an additive bf16 mask.
        mask_add = jnp.where(mask, jnp.float32(_NEG_INF),
                             jnp.float32(0.0)).astype(jnp.bfloat16)

    ctx, attn = scaled_dot_product_attention(
        q, k, v, mask_add=mask_add, attn_dtype=attn_dtype,
        ctx_dtype=query.dtype, vmem_budget_bytes=vmem_budget_bytes)

    # Only the small context tensor needs a layout fix-up:
    # (H, B, Tq, dh) -> (B, Tq, H, dh) -> (B, Tq, D).
    context = jnp.transpose(ctx, (1, 2, 0, 3)).reshape(B, Tq, D)
    return context, attn


# ---------------------------------------------------------------------------
# Pure-JAX reference (mirrors the PyTorch forward) for correctness checking.
# ---------------------------------------------------------------------------
def _reference_mha(query, key, value, params, num_heads, mask=None):
    B, Tq, D = query.shape
    Tk = key.shape[1]
    dh = D // num_heads

    def proj(x, w, b):
        return jnp.einsum("btd,de->bte", x, w) + b

    q = proj(query, params["wq"], params["bq"]).reshape(B, Tq, num_heads, dh)
    k = proj(key, params["wk"], params["bk"]).reshape(B, Tk, num_heads, dh)
    v = proj(value, params["wv"], params["bv"]).reshape(B, Tk, num_heads, dh)
    q = jnp.transpose(q, (2, 0, 1, 3)).reshape(num_heads * B, Tq, dh)
    k = jnp.transpose(k, (2, 0, 1, 3)).reshape(num_heads * B, Tk, dh)
    v = jnp.transpose(v, (2, 0, 1, 3)).reshape(num_heads * B, Tk, dh)
    s = jnp.einsum("bqd,bkd->bqk", q, k) / jnp.sqrt(jnp.float32(dh))
    if mask is not None:
        s = jnp.where(jnp.tile(mask, (num_heads, 1, 1)), _NEG_INF, s)
    attn = jax.nn.softmax(s, axis=-1)
    ctx = jnp.einsum("bqk,bkd->bqd", attn, v)
    ctx = ctx.reshape(num_heads, B, Tq, dh)
    ctx = jnp.transpose(ctx, (1, 2, 0, 3)).reshape(B, Tq, D)
    return ctx, attn


# ---------------------------------------------------------------------------
if __name__ == "__main__":
    B, T, D, H = 2, 8, 32, 4

    root = jax.random.PRNGKey(0)
    keys = jax.random.split(root, 9)

    q_in = jax.random.normal(keys[0], (B, T, D), jnp.float32)
    k_in = jax.random.normal(keys[1], (B, T, D), jnp.float32)
    v_in = jax.random.normal(keys[2], (B, T, D), jnp.float32)

    # Deterministic synthetic parameters (Linear(dim, dim) x3), stored as (in, out).
    params = {
        "wq": 0.1 * jax.random.normal(keys[3], (D, D), jnp.float32),
        "bq": 0.1 * jax.random.normal(keys[4], (D,), jnp.float32),
        "wk": 0.1 * jax.random.normal(keys[5], (D, D), jnp.float32),
        "bk": 0.1 * jax.random.normal(keys[6], (D,), jnp.float32),
        "wv": 0.1 * jax.random.normal(keys[7], (D, D), jnp.float32),
        "bv": 0.1 * jax.random.normal(keys[8], (D,), jnp.float32),
    }

    # --- cross-attention inputs, unmasked (module default) ---
    context, attn = multi_head_attention(q_in, k_in, v_in, params, num_heads=H)
    jax.block_until_ready((context, attn))
    assert context.shape == (B, T, D) and context.dtype == jnp.float32
    assert attn.shape == (H * B, T, T)

    ref_ctx, ref_attn = _reference_mha(q_in, k_in, v_in, params, H)
    a32 = attn.astype(jnp.float32)
    assert bool(jnp.allclose(jnp.sum(a32, axis=-1), 1.0, atol=1e-2))
    assert bool(jnp.allclose(context, ref_ctx, atol=2e-2, rtol=2e-2))
    assert bool(jnp.allclose(a32, ref_attn, atol=2e-2, rtol=2e-2))

    # --- self-attention (fused (D, 3D) projection path) ---
    ctx_s, attn_s = multi_head_attention(q_in, q_in, q_in, params, num_heads=H)
    jax.block_until_ready((ctx_s, attn_s))
    ref_ctx_s, ref_attn_s = _reference_mha(q_in, q_in, q_in, params, H)
    assert bool(jnp.allclose(ctx_s, ref_ctx_s, atol=2e-2, rtol=2e-2))
    assert bool(jnp.allclose(attn_s.astype(jnp.float32), ref_attn_s,
                             atol=2e-2, rtol=2e-2))

    # --- masked path (PyTorch masked_fill(mask, -1e9)) ---
    mask = jax.random.bernoulli(jax.random.PRNGKey(42), 0.25, (B, T, T))
    mask = mask.at[:, :, 0].set(False)  # keep at least one unmasked key per row
    ctx_m, attn_m = multi_head_attention(q_in, k_in, v_in, params,
                                         num_heads=H, mask=mask)
    jax.block_until_ready((ctx_m, attn_m))
    ref_ctx_m, ref_attn_m = _reference_mha(q_in, k_in, v_in, params, H, mask=mask)
    assert bool(jnp.allclose(ctx_m, ref_ctx_m, atol=2e-2, rtol=2e-2))
    assert bool(jnp.allclose(attn_m.astype(jnp.float32), ref_attn_m,
                             atol=2e-2, rtol=2e-2))

    print("KERNEL_OK")
</pallas_src>

<mosaic_0001>
module attributes {stable_mosaic.version = 11 : i64} {
  func.func @_proj_heads_kernel(%arg0: i32, %arg1: i32, %arg2: memref<1x8x32xf32, #tpu.memory_space<vmem>>, %arg3: memref<32x32xf32, #tpu.memory_space<vmem>>, %arg4: memref<1x32xf32, #tpu.memory_space<vmem>>, %arg5: memref<4x1x8x8xbf16, #tpu.memory_space<vmem>>) attributes {dimension_semantics = [#tpu.dimension_semantics<parallel>, #tpu.dimension_semantics<arbitrary>], iteration_bounds = array<i64: 2, 1>, scalar_prefetch = 0 : i64, scratch_operands = 0 : i64, tpu.core_type = #tpu.core_type<tc>, window_params = [{transform_indices = @transform_0, window_bounds = array<i64: 1, 8, 32>}, {pipeline_mode = #tpu.pipeline_mode<synchronous>, transform_indices = @transform_1, window_bounds = array<i64: 32, 32>}, {pipeline_mode = #tpu.pipeline_mode<synchronous>, transform_indices = @transform_2, window_bounds = array<i64: 1, 32>}, {transform_indices = @transform_3, window_bounds = array<i64: 4, 1, 8, 8>}]} {
    %c0 = arith.constant 0 : index
    %c0_0 = arith.constant 0 : index
    %c0_1 = arith.constant 0 : index
    %0 = vector.load %arg2[%c0, %c0_0, %c0_1] : memref<1x8x32xf32, #tpu.memory_space<vmem>>, vector<1x8x32xf32>
    %1 = vector.shape_cast %0 : vector<1x8x32xf32> to vector<8x32xf32>
    %c0_2 = arith.constant 0 : index
    %c0_3 = arith.constant 0 : index
    %2 = vector.load %arg3[%c0_2, %c0_3] : memref<32x32xf32, #tpu.memory_space<vmem>>, vector<32x32xf32>
    %cst = arith.constant dense<0.000000e+00> : vector<8x32xf32>
    %3 = tpu.matmul %1, %2, %cst {dimension_numbers = #tpu.dot_dimension_numbers<[1], [0], [0], [1], [0, 0, 1, 1], [], []>} : vector<8x32xf32>, vector<32x32xf32>, vector<8x32xf32> -> vector<8x32xf32>
    %c0_4 = arith.constant 0 : index
    %c0_5 = arith.constant 0 : index
    %4 = vector.load %arg4[%c0_4, %c0_5] : memref<1x32xf32, #tpu.memory_space<vmem>>, vector<1x32xf32>
    %5 = vector.broadcast %4 : vector<1x32xf32> to vector<8x32xf32>
    %6 = arith.addf %3, %5 : vector<8x32xf32>
    %7 = vector.extract_strided_slice %6 {offsets = [0, 0], sizes = [8, 8], strides = [1, 1]} : vector<8x32xf32> to vector<8x8xf32>
    %8 = arith.truncf %7 : vector<8x8xf32> to vector<8x8xbf16>
    %c0_6 = arith.constant 0 : index
    %c0_7 = arith.constant 0 : index
    %c0_8 = arith.constant 0 : index
    %c0_9 = arith.constant 0 : index
    %9 = vector.load %arg5[%c0_6, %c0_7, %c0_8, %c0_9] : memref<4x1x8x8xbf16, #tpu.memory_space<vmem>>, vector<1x1x8x8xbf16>
    %10 = vector.shape_cast %9 : vector<1x1x8x8xbf16> to vector<8x8xbf16>
    %11 = vector.shape_cast %8 : vector<8x8xbf16> to vector<1x1x8x8xbf16>
    tpu.vector_store %arg5[%c0_6, %c0_7, %c0_8, %c0_9], %11 {strides = array<i32>} : memref<4x1x8x8xbf16, #tpu.memory_space<vmem>>, vector<1x1x8x8xbf16>,
    %12 = vector.extract_strided_slice %6 {offsets = [0, 8], sizes = [8, 8], strides = [1, 1]} : vector<8x32xf32> to vector<8x8xf32>
    %13 = arith.truncf %12 : vector<8x8xf32> to vector<8x8xbf16>
    %c1 = arith.constant 1 : index
    %c0_10 = arith.constant 0 : index
    %c0_11 = arith.constant 0 : index
    %c0_12 = arith.constant 0 : index
    %14 = vector.load %arg5[%c1, %c0_10, %c0_11, %c0_12] : memref<4x1x8x8xbf16, #tpu.memory_space<vmem>>, vector<1x1x8x8xbf16>
    %15 = vector.shape_cast %14 : vector<1x1x8x8xbf16> to vector<8x8xbf16>
    %16 = vector.shape_cast %13 : vector<8x8xbf16> to vector<1x1x8x8xbf16>
    tpu.vector_store %arg5[%c1, %c0_10, %c0_11, %c0_12], %16 {strides = array<i32>} : memref<4x1x8x8xbf16, #tpu.memory_space<vmem>>, vector<1x1x8x8xbf16>,
    %17 = vector.extract_strided_slice %6 {offsets = [0, 16], sizes = [8, 8], strides = [1, 1]} : vector<8x32xf32> to vector<8x8xf32>
    %18 = arith.truncf %17 : vector<8x8xf32> to vector<8x8xbf16>
    %c2 = arith.constant 2 : index
    %c0_13 = arith.constant 0 : index
    %c0_14 = arith.constant 0 : index
    %c0_15 = arith.constant 0 : index
    %19 = vector.load %arg5[%c2, %c0_13, %c0_14, %c0_15] : memref<4x1x8x8xbf16, #tpu.memory_space<vmem>>, vector<1x1x8x8xbf16>
    %20 = vector.shape_cast %19 : vector<1x1x8x8xbf16> to vector<8x8xbf16>
    %21 = vector.shape_cast %18 : vector<8x8xbf16> to vector<1x1x8x8xbf16>
    tpu.vector_store %arg5[%c2, %c0_13, %c0_14, %c0_15], %21 {strides = array<i32>} : memref<4x1x8x8xbf16, #tpu.memory_space<vmem>>, vector<1x1x8x8xbf16>,
    %22 = vector.extract_strided_slice %6 {offsets = [0, 24], sizes = [8, 8], strides = [1, 1]} : vector<8x32xf32> to vector<8x8xf32>
    %23 = arith.truncf %22 : vector<8x8xf32> to vector<8x8xbf16>
    %c3 = arith.constant 3 : index
    %c0_16 = arith.constant 0 : index
    %c0_17 = arith.constant 0 : index
    %c0_18 = arith.constant 0 : index
    %24 = vector.load %arg5[%c3, %c0_16, %c0_17, %c0_18] : memref<4x1x8x8xbf16, #tpu.memory_space<vmem>>, vector<1x1x8x8xbf16>
    %25 = vector.shape_cast %24 : vector<1x1x8x8xbf16> to vector<8x8xbf16>
    %26 = vector.shape_cast %23 : vector<8x8xbf16> to vector<1x1x8x8xbf16>
    tpu.vector_store %arg5[%c3, %c0_16, %c0_17, %c0_18], %26 {strides = array<i32>} : memref<4x1x8x8xbf16, #tpu.memory_space<vmem>>, vector<1x1x8x8xbf16>,
    return
  }
  func.func @transform_0(%arg0: i32, %arg1: i32) -> (i32, i32, i32) {
    %c0_i32 = arith.constant 0 : i32
    %c0_i32_0 = arith.constant 0 : i32
    return %arg0, %arg1, %c0_i32 : i32, i32, i32
  }
  func.func @transform_1(%arg0: i32, %arg1: i32) -> (i32, i32) {
    %c0_i32 = arith.constant 0 : i32
    %c0_i32_0 = arith.constant 0 : i32
    %c0_i32_1 = arith.constant 0 : i32
    return %c0_i32, %c0_i32_0 : i32, i32
  }
  func.func @transform_2(%arg0: i32, %arg1: i32) -> (i32, i32) {
    %c0_i32 = arith.constant 0 : i32
    %c0_i32_0 = arith.constant 0 : i32
    %c0_i32_1 = arith.constant 0 : i32
    return %c0_i32, %c0_i32_0 : i32, i32
  }
  func.func @transform_3(%arg0: i32, %arg1: i32) -> (i32, i32, i32, i32) {
    %c0_i32 = arith.constant 0 : i32
    %c0_i32_0 = arith.constant 0 : i32
    %c0_i32_1 = arith.constant 0 : i32
    return %c0_i32, %arg0, %arg1, %c0_i32_0 : i32, i32, i32, i32
  }
}

</mosaic_0001>

<llo_original>
// kernel: tpu_custom_call.1
$region0: #{tpu_custom_call.1}
  #allocation0 [shape = 'u32[]', space=smem, size = 0x4, offset = 0x4, fixed_abs, tag = 'smem constant byte address 0x4 - core index']
  #allocation1 [shape = 'u32[144,128]{1,0:T(1,128)}', space=vmem, size = 0x12000, scoped, tag = 'internal scratch']
  %s0 = inlined_call_operand.hbm [shape: f32[2,8,32], index: 0, kind: input, shape index: {}]
  %s1 = inlined_call_operand.hbm [shape: f32[32,32], index: 1, kind: input, shape index: {}]
  %s2 = inlined_call_operand.vmem [shape: f32[1,32], index: 2, kind: input, shape index: {}]
  %s3 = inlined_call_operand.hbm [shape: bf16[4,2,8,8], index: 3, kind: output, shape index: {}]
  %s4 = sld [smem:[#allocation0]]
  $region53: #{tpu_custom_call.1} parent=0
    _
  %s6 = ssub.s32 1, %s4
  %s7 = scalar_select 0, %s6, %s4
  $region1: #{tpu_custom_call.1} parent=0
    #allocation2 [shape = 'u8[8192]{0}', space=vmem, size = 0x2000, scoped, tag = 'input window, operand 0']
    #allocation3 [shape = 's32[2]{0}', space=sflag, size = 0x8, scoped, tag = 'scoped memory for tpu_custom_call.1']
    #allocation4 [shape = 's32[2]{0}', space=sflag, size = 0x8, scoped, tag = 'scoped memory for tpu_custom_call.1']
    #allocation5 [shape = 'u8[16384]{0}', space=vmem, size = 0x4000, scoped, tag = 'input window, operand 1, single buffered']
    #allocation6 [shape = 's32[1]{0}', space=sflag, size = 0x4, scoped, tag = 'scoped memory for tpu_custom_call.1']
    #allocation7 [shape = 'u8[16384]{0}', space=vmem, size = 0x4000, scoped, tag = 'output window, operand 0']
    %8 = vsyncpa [#allocation3], 0
    %s9 = scalar_lea.sflag [#allocation3], 1
    %10 = vsyncpa %s9, 0
    %11 = vsyncpa [#allocation6], 0
    %12 = vsyncpa [#allocation4], 0
    %s13 = scalar_lea.sflag [#allocation4], 1
    %14 = vsyncpa %s13, 0
    loop: start=0, step=1, limit=4
    $region2: #{tpu_custom_call.1} parent=1 // loop_pre_header
      _
    $region3: #{tpu_custom_call.1} parent=1 // loop_header
      %s16 = sphi 0, %s20
      %p17 = scmp.ge.s32.totalorder %s16, 4
      %s23 = sphi 0, %s35
      %s24 = sphi 0, %s31
      %s25 = sphi 0, %s23
      %s26 = sphi 0, %s24
      %s27 = sphi 0, %s25
      %s28 = sphi 0, %s26
      %s40 = sphi 0, %s42
      %s43 = sphi 0, %s40
      %s44 = sphi 0, %s43
      %s60 = sphi 0, %s44
      %s64 = sphi 0, %s64
      %s66 = sphi 0, %s64
      %s67 = sphi 0, %s66
      %s81 = sphi 0, %s67
      %s85 = sphi 0, %s85
      %s87 = sphi 0, %s85
      %s88 = sphi 0, %s87
      %s102 = sphi 0, %s88
      %s110 = sphi 0, %s112
      %s113 = sphi 0, %s110
      %s114 = sphi 0, %s113
      %s130 = sphi 0, %s114
    $region4: #{tpu_custom_call.1} parent=1 // loop_header_branch
      %19 = sbr.rel (%p17) target = $region8
    $region5: #{tpu_custom_call.1} parent=1 // loop_body
      %s21 = ssub.s32 %s16, 1
      %s22 = ssub.s32 %s16, 2
      %s29 = sadd.s32 1, %s24
      %p30 = scmp.ge.s32.totalorder %s29, 1
      %s31 = scalar_select %p30, 0, %s29
      %s32 = sadd.s32 1, %s23
      %s33 = scalar_select %p30, %s32, %s23
      %p34 = scmp.ge.s32.totalorder %s33, 2
      %s35 = scalar_select %p34, 0, %s33
      %s36 = ssub.s32 %s23, %s35
      %s37 = ssub.s32 %s24, %s31
      %s38 = sor.u32 %s36, %s37
      %p39 = scmp.eq.s32.totalorder %s38, 0
      %s41 = sadd.s32 %s40, 1
      %s42 = scalar_select %p39, %s40, %s41
      %p45 = pneg %p39
      %p46 = scmp.eq.s32.totalorder %s16, 1
      %p47 = por %p45, %p46
      %p48 = scmp.ne.s32.totalorder %s40, %s43
      %p49 = scmp.eq.s32.totalorder %s16, 0
      %p50 = por %p48, %p49
      %p51 = scmp.ne.s32.totalorder %s40, %s43
      %p52 = scmp.eq.s32.totalorder %s21, 1
      %p53 = por %p51, %p52
      %p54 = scmp.ne.s32.totalorder %s43, %s44
      %p55 = scmp.eq.s32.totalorder %s21, 0
      %p56 = por %p54, %p55
      %p57 = scmp.ne.s32.totalorder %s43, %s44
      %p58 = scmp.eq.s32.totalorder %s22, 1
      %p59 = por %p57, %p58
      %p61 = scmp.ne.s32.totalorder %s44, %s60
      %p62 = scmp.eq.s32.totalorder %s22, 0
      %p63 = por %p61, %p62
      %s65 = sadd.s32 %s64, 1
      %p68 = scmp.eq.s32.totalorder %s16, 1
      %p69 = scmp.ne.s32.totalorder %s64, %s66
      %p70 = scmp.eq.s32.totalorder %s16, 0
      %p71 = por %p69, %p70
      %p72 = scmp.ne.s32.totalorder %s64, %s66
      %p73 = scmp.eq.s32.totalorder %s21, 1
      %p74 = por %p72, %p73
      %p75 = scmp.ne.s32.totalorder %s66, %s67
      %p76 = scmp.eq.s32.totalorder %s21, 0
      %p77 = por %p75, %p76
      %p78 = scmp.ne.s32.totalorder %s66, %s67
      %p79 = scmp.eq.s32.totalorder %s22, 1
      %p80 = por %p78, %p79
      %p82 = scmp.ne.s32.totalorder %s67, %s81
      %p83 = scmp.eq.s32.totalorder %s22, 0
      %p84 = por %p82, %p83
      %s86 = sadd.s32 %s85, 1
      %p89 = scmp.eq.s32.totalorder %s16, 1
      %p90 = scmp.ne.s32.totalorder %s85, %s87
      %p91 = scmp.eq.s32.totalorder %s16, 0
      %p92 = por %p90, %p91
      %p93 = scmp.ne.s32.totalorder %s85, %s87
      %p94 = scmp.eq.s32.totalorder %s21, 1
      %p95 = por %p93, %p94
      %p96 = scmp.ne.s32.totalorder %s87, %s88
      %p97 = scmp.eq.s32.totalorder %s21, 0
      %p98 = por %p96, %p97
      %p99 = scmp.ne.s32.totalorder %s87, %s88
      %p100 = scmp.eq.s32.totalorder %s22, 1
      %p101 = por %p99, %p100
      %p103 = scmp.ne.s32.totalorder %s88, %s102
      %p104 = scmp.eq.s32.totalorder %s22, 0
      %p105 = por %p103, %p104
      %s106 = ssub.s32 %s23, %s35
      %s107 = ssub.s32 %s24, %s31
      %s108 = sor.u32 %s106, %s107
      %p109 = scmp.eq.s32.totalorder %s108, 0
      %s111 = sadd.s32 %s110, 1
      %s112 = scalar_select %p109, %s110, %s111
      %p115 = pneg %p109
      %p116 = scmp.eq.s32.totalorder %s16, 1
      %p117 = por %p115, %p116
      %p118 = scmp.ne.s32.totalorder %s110, %s113
      %p119 = scmp.eq.s32.totalorder %s16, 0
      %p120 = por %p118, %p119
      %p121 = scmp.ne.s32.totalorder %s110, %s113
      %p122 = scmp.eq.s32.totalorder %s21, 1
      %p123 = por %p121, %p122
      %p124 = scmp.ne.s32.totalorder %s113, %s114
      %p125 = scmp.eq.s32.totalorder %s21, 0
      %p126 = por %p124, %p125
      %p127 = scmp.ne.s32.totalorder %s113, %s114
      %p128 = scmp.eq.s32.totalorder %s22, 1
      %p129 = por %p127, %p128
      %p131 = scmp.ne.s32.totalorder %s114, %s130
      %p132 = scmp.eq.s32.totalorder %s22, 0
      %p133 = por %p131, %p132
      %p134 = scmp.le.s32.totalorder 1, %s16
      %p135 = scmp.lt.s32.totalorder %s16, 3
      %p136 = pnand %p134, %p135
      %p137 = pneg %p136
      // Predicated region
      $region9: #{tpu_custom_call.1} parent=5 // pred_check
        _
      $region10: #{tpu_custom_call.1} parent=5 // pred_check_branch
        %139 = sbr.rel (%p136) target = $region12
      $region11: #{tpu_custom_call.1} parent=5 // pred_region
        %s140 = ssub.s32 %s16, 1
        // Predicated region
        $region13: #{tpu_custom_call.1} parent=11 // pred_check
          %p141 = pneg %p77
        $region14: #{tpu_custom_call.1} parent=11 // pred_check_branch
          %143 = sbr.rel (%p141) target = $region16
        $region15: #{tpu_custom_call.1} parent=11 // pred_region
          %s145 = ssub.s32 512, 512
          %146 = vsyncadd [#allocation6], %s145
          %s147 = sshll.u32 [#allocation5], 4
          %s148 = int_to_ptr.vmem [resolvable:$true] %s147
          %153 = dma.hbm_to_vmem [thread:$0]  %s1, 512, %s148, [#allocation6], 128, 128, 8
        $region16: #{tpu_custom_call.1} parent=11 // pred_fallthru
          _
        // Predicated region
        $region17: #{tpu_custom_call.1} parent=11 // pred_check
          %p154 = pneg %p98
        $region18: #{tpu_custom_call.1} parent=11 // pred_check_branch
          %156 = sbr.rel (%p154) target = $region20
        $region19: #{tpu_custom_call.1} parent=11 // pred_region
          _
        $region20: #{tpu_custom_call.1} parent=11 // pred_fallthru
          _
      $region12: #{tpu_custom_call.1} parent=5 // pred_fallthru
        _
      %p157 = scmp.lt.s32.totalorder %s16, 2
      // Predicated region
      $region21: #{tpu_custom_call.1} parent=5 // pred_check
        %p158 = pneg %p157
      $region22: #{tpu_custom_call.1} parent=5 // pred_check_branch
        %160 = sbr.rel (%p158) target = $region24
      $region23: #{tpu_custom_call.1} parent=5 // pred_region
        // Predicated region
        $region25: #{tpu_custom_call.1} parent=23 // pred_check
          %p161 = pneg %p50
        $region26: #{tpu_custom_call.1} parent=23 // pred_check_branch
          %163 = sbr.rel (%p161) target = $region28
        $region27: #{tpu_custom_call.1} parent=23 // pred_region
          %s164 = sand.u32 %s40, 1
          %s165 = scalar_lea.sflag [#allocation3], %s164
          %s166 = sand.u32 %s40, 1
          %s167 = smul.addr %s166, 8
          %s168 = scalar_lea.vmem [#allocation2], %s167
          %s170 = ssub.s32 128, 128
          %171 = vsyncadd %s165, %s170
          %s172 = sadd.s32 %s24, %s23
          %s173 = smul.addr %s172, 128
          %s174 = scalar_lea.hbm %s0, %s173
          %s176 = sshll.u32 %s168, 4
          %s177 = int_to_ptr.vmem [resolvable:$true] %s176
          %179 = dma.hbm_to_vmem [thread:$0]  %s174, 128, %s177, %s165
        $region28: #{tpu_custom_call.1} parent=23 // pred_fallthru
          _
      $region24: #{tpu_custom_call.1} parent=5 // pred_fallthru
        _
      %p180 = scmp.le.s32.totalorder 1, %s16
      %p181 = scmp.lt.s32.totalorder %s16, 3
      %p182 = pnand %p180, %p181
      %p183 = pneg %p182
      // Predicated region
      $region29: #{tpu_custom_call.1} parent=5 // pred_check
        _
      $region30: #{tpu_custom_call.1} parent=5 // pred_check_branch
        %185 = sbr.rel (%p182) target = $region32
      $region31: #{tpu_custom_call.1} parent=5 // pred_region
        %s186 = ssub.s32 %s16, 1
        %s187 = sand.u32 %s43, 1
        %s188 = scalar_lea.sflag [#allocation3], %s187
        %s189 = sand.u32 %s43, 1
        %s190 = smul.addr %s189, 8
        %s191 = scalar_lea.vmem [#allocation2], %s190
        // Predicated region
        $region33: #{tpu_custom_call.1} parent=31 // pred_check
          %p192 = pneg %p56
        $region34: #{tpu_custom_call.1} parent=31 // pred_check_branch
          %194 = sbr.rel (%p192) target = $region36
        $region35: #{tpu_custom_call.1} parent=31 // pred_region
          %195 = dma.done %s188, 128
        $region36: #{tpu_custom_call.1} parent=31 // pred_fallthru
          _
        // Predicated region
        $region37: #{tpu_custom_call.1} parent=31 // pred_check
          %p196 = pneg %p77
        $region38: #{tpu_custom_call.1} parent=31 // pred_check_branch
          %198 = sbr.rel (%p196) target = $region40
        $region39: #{tpu_custom_call.1} parent=31 // pred_region
          %199 = dma.done [#allocation6], 512
        $region40: #{tpu_custom_call.1} parent=31 // pred_fallthru
          _
        %s200 = sand.u32 %s43, 1
        %s201 = scalar_lea.sflag [#allocation3], %s200
        %s202 = sand.u32 %s43, 1
        %s203 = smul.addr %s202, 8
        %s204 = scalar_lea.vmem [#allocation2], %s203
        %p205 = pneg %p56
        %p206 = pneg %p53
        %p207 = pneg %p77
        %p208 = pneg %p74
        %p209 = pneg %p98
        %p210 = pneg %p95
        %p211 = pneg %p126
        %p212 = pneg %p123
        %s213 = sand.u32 %s113, 1
        %s214 = scalar_lea.sflag [#allocation4], %s213
        %s215 = sand.u32 %s113, 1
        %s216 = smul.addr %s215, 16
        %s217 = scalar_lea.vmem [#allocation7], %s216
        %v218 = vld [vmem:[%s191] sm:$0xff]
        %v219 = vld [vmem:[#allocation5] sm:$0xff]
        %v220 = vld [vmem:[#allocation5 + $0x8] sm:$0xff]
        %v221 = vld [vmem:[#allocation5 + $0x10] sm:$0xff]
        %v222 = vld [vmem:[#allocation5 + $0x18] sm:$0xff]
        %v223 = vld [vmem:[%s2] sm:$0x1]
        %v225 = vlaneseq
        %v226 = vshrl.u32 %v225, 7
        %v227 = vsub.s32 0, %v226
        %v228 = vrot.slane %v223, %v227
        %vm230 = vcmask 261120
        %v232 = vsel %vm230, %v218, 0
        %234 = vmatprep.subr.mxu0 0.0
        %235 = vmatpush1.msra.mxu0 0.0
        %236 = vmatprep.subr.mxu0 0.0
        %237 = vmatpush1.msra.mxu0 0.0
        %238 = vmatprep.subr.mxu0 0.0
        %239 = vmatpush1.msra.mxu0 0.0
        %240 = vmatprep.subr.mxu0 0.0
        %241 = vmatpush1.msra.mxu0 0.0
        %242 = vmatprep.subr.mxu0 0.0
        %243 = vmatpush1.msra.mxu0 0.0
        %244 = vmatprep.subr.mxu0 0.0
        %245 = vmatpush1.msra.mxu0 0.0
        %246 = vmatprep.subr.mxu0 0.0
        %247 = vmatpush1.msra.mxu0 0.0
        %248 = vmatprep.subr.mxu0 0.0
        %249 = vmatpush1.msra.mxu0 0.0
        %250 = vmatprep.subr.mxu0 0.0
        %251 = vmatpush1.msra.mxu0 0.0
        %252 = vmatprep.subr.mxu0 0.0
        %253 = vmatpush1.msra.mxu0 0.0
        %254 = vmatprep.subr.mxu0 0.0
        %255 = vmatpush1.msra.mxu0 0.0
        %256 = vmatprep.subr.mxu0 0.0
        %257 = vmatpush1.msra.mxu0 0.0
        %258 = vmatprep.subr.mxu0 0.0
        %259 = vmatpush1.msra.mxu0 %v222
        %260 = vmatprep.subr.mxu0 0.0
        %261 = vmatpush1.msra.mxu0 %v221
        %262 = vmatprep.subr.mxu0 0.0
        %263 = vmatpush1.msra.mxu0 %v220
        %264 = vmatprep.subr.mxu0 0.0
        %265 = vmatpush1.msra.mxu0 %v219
        %266 = vmatprep.subr.mxu0 0.0
        %267 = vmatpush2.msra.mxu0 0.0
        %268 = vmatprep.subr.mxu0 0.0
        %269 = vmatpush2.msra.mxu0 0.0
        %270 = vmatprep.subr.mxu0 0.0
        %271 = vmatpush2.msra.mxu0 0.0
        %272 = vmatprep.subr.mxu0 0.0
        %273 = vmatpush2.msra.mxu0 0.0
        %274 = vmatprep.subr.mxu0 0.0
        %275 = vmatpush2.msra.mxu0 0.0
        %276 = vmatprep.subr.mxu0 0.0
        %277 = vmatpush2.msra.mxu0 0.0
        %278 = vmatprep.subr.mxu0 0.0
        %279 = vmatpush2.msra.mxu0 0.0
        %280 = vmatprep.subr.mxu0 0.0
        %281 = vmatpush2.msra.mxu0 0.0
        %282 = vmatprep.subr.mxu0 0.0
        %283 = vmatpush2.msra.mxu0 0.0
        %284 = vmatprep.subr.mxu0 0.0
        %285 = vmatpush2.msra.mxu0 0.0
        %286 = vmatprep.subr.mxu0 0.0
        %287 = vmatpush2.msra.mxu0 0.0
        %288 = vmatprep.subr.mxu0 0.0
        %289 = vmatpush2.msra.mxu0 0.0
        %290 = vmatprep.subr.mxu0 0.0
        %291 = vmatpush2.msra.mxu0 0.0
        %292 = vmatprep.subr.mxu0 0.0
        %293 = vmatpush2.msra.mxu0 0.0
        %294 = vmatprep.subr.mxu0 0.0
        %295 = vmatpush2.msra.mxu0 0.0
        %296 = vmatprep.subr.mxu0 0.0
        %297 = vmatpush2.msra.mxu0 0.0
        %298 = vmatprep.mubr.f32.mxu0 0.0
        %299 = vmatmul.mubr.f32.gmra.mxu0 %v232
        %v300 = vpop.f32.mrf.mxu0
        %v301 = vadd.f32 %v228, %v300
        %v302 = vpop.f32.mrf.mxu0
        %303 = vdwg.mxu0
        %v304 = vpack.c.bf16 %v301, %v301
        %vm305 = vcmask 60416
        %306 = vst.msk [vmem:[%s217] sm:$0xf] %vm305, %v304
        %v308 = vunpack.c.l.b16 %v304
        %v309 = vpack.c.b16 %v308, %v308
        %310 = vrot.lane.b32.xlu0 %v309, 120
        %v311 = vpop.permute.xlu0 %310
        %s313 = scalar_lea.vmem %s217, 4 [#allocation7]
        %314 = vst.msk [vmem:[%s313] sm:$0xf] %vm305, %v311
        %315 = vrot.lane.b32.xlu0 %v309, 112
        %v316 = vpop.permute.xlu0 %315
        %s318 = scalar_lea.vmem %s217, 8 [#allocation7]
        %319 = vst.msk [vmem:[%s318] sm:$0xf] %vm305, %v316
        %320 = vrot.lane.b32.xlu0 %v309, 104
        %v321 = vpop.permute.xlu0 %320
        %s323 = scalar_lea.vmem %s217, 12 [#allocation7]
        %324 = vst.msk [vmem:[%s323] sm:$0xf] %vm305, %v321
        %s325 = sand.u32 %s113, 1
        %s326 = scalar_lea.sflag [#allocation4], %s325
        %s327 = sand.u32 %s113, 1
        %s328 = smul.addr %s327, 16
        %s329 = scalar_lea.vmem [#allocation7], %s328
        // Predicated region
        $region41: #{tpu_custom_call.1} parent=31 // pred_check
          %p330 = pneg %p123
        $region42: #{tpu_custom_call.1} parent=31 // pred_check_branch
          %332 = sbr.rel (%p330) target = $region44
        $region43: #{tpu_custom_call.1} parent=31 // pred_region
          %s334 = ssub.s32 256, 256
          %335 = vsyncadd %s326, %s334
          %s336 = sadd.s32 %s26, %s25
          %s337 = smul.addr %s336, 64
          %s338 = scalar_lea.hbm %s3, %s337
          %s339 = sshll.u32 %s329, 4
          %s340 = int_to_ptr.vmem [resolvable:$true] %s339
          %345 = dma.vmem_to_hbm [thread:$0]  %s340, 256, %s338, %s326, 64, 128, 4
        $region44: #{tpu_custom_call.1} parent=31 // pred_fallthru
          _
      $region32: #{tpu_custom_call.1} parent=5 // pred_fallthru
        _
      %p346 = scmp.le.s32.totalorder 2, %s16
      // Predicated region
      $region45: #{tpu_custom_call.1} parent=5 // pred_check
        %p347 = pneg %p346
      $region46: #{tpu_custom_call.1} parent=5 // pred_check_branch
        %349 = sbr.rel (%p347) target = $region48
      $region47: #{tpu_custom_call.1} parent=5 // pred_region
        %s350 = ssub.s32 %s16, 2
        // Predicated region
        $region49: #{tpu_custom_call.1} parent=47 // pred_check
          %p351 = pneg %p129
        $region50: #{tpu_custom_call.1} parent=47 // pred_check_branch
          %353 = sbr.rel (%p351) target = $region52
        $region51: #{tpu_custom_call.1} parent=47 // pred_region
          %s354 = sand.u32 %s114, 1
          %s355 = scalar_lea.sflag [#allocation4], %s354
          %s356 = sand.u32 %s114, 1
          %s357 = smul.addr %s356, 16
          %s358 = scalar_lea.vmem [#allocation7], %s357
          %359 = dma.done %s355, 256
        $region52: #{tpu_custom_call.1} parent=47 // pred_fallthru
          _
      $region48: #{tpu_custom_call.1} parent=5 // pred_fallthru
        _
    $region6: #{tpu_custom_call.1} parent=1 // loop_footer
      %s20 = sadd.s32 1, %s16
    $region7: #{tpu_custom_call.1} parent=1 // loop_footer_branch
      %15 = sbr.rel target = $region3
    $region8: #{tpu_custom_call.1} parent=1 // loop_exit
      _
    %360 = vsyncpa [#allocation3], 1
    %s361 = scalar_lea.sflag [#allocation3], 1
    %362 = vsyncpa %s361, 1
    %363 = vsyncpa [#allocation6], 1
    %364 = vsyncpa [#allocation4], 1
    %s365 = scalar_lea.sflag [#allocation4], 1
    %366 = vsyncpa %s365, 1

</llo_original>
